<compile_context>
chip_gen: v6e
topology: v6e:2x2x1
jax: 0.10.0
libtpu: 0.0.40
codegen_flags: <defaults>
</compile_context>

<pallas_src>
import functools

import jax
import jax.numpy as jnp
from jax.experimental import pallas as pl
from jax.experimental.pallas import tpu as pltpu


LANE = 128          # TPU lane width: pad every feature dim to a multiple of this
SUBLANE = 8         # f32 sublane count
NEG_BIG = -1e30     # bias for padded logit columns -> exp() underflows to exactly 0


def _round_up(n, m):
    return ((n + m - 1) // m) * m


def _cdiv(a, b):
    return -(-a // b)


def _make_actor_kernel(n_layers):
    """Fused MLP kernel. Ref layout: (x, w1, b1, ..., wN, bN, out).
    LeakyReLU(0.05) after every layer except the last; stable softmax over dim=1."""

    def kernel(*refs):
        x_ref, o_ref = refs[0], refs[-1]
        wb = refs[1:-1]

        h = x_ref[...]                                    # f32 activations
        for li in range(n_layers):
            w = wb[2 * li][...]                           # bf16 weight (in_p, out_p)
            b = wb[2 * li + 1][0:1, :]                    # f32 bias row (from 8-sublane tile)
            # bf16 operands into the MXU, f32 accumulation; bias add in f32.
            h = jnp.dot(h.astype(jnp.bfloat16), w,
                        preferred_element_type=jnp.float32) + b
            if li < n_layers - 1:
                # LeakyReLU(0.05): one vmul + vmax instead of cmp + select
                h = jnp.maximum(h, 0.05 * h)

        # Numerically-stable softmax over dim=1. Padded logit columns carry a
        # NEG_BIG bias so exp() is exactly 0 there. Exact divide (not approx
        # reciprocal) so rows sum to 1 to f32 precision.
        m = jnp.max(h, axis=1, keepdims=True)
        e = jnp.exp(h - m)
        o_ref[...] = e / jnp.sum(e, axis=1, keepdims=True)

    return kernel


def prepare_actor_params(params):
    """One-time parameter prep (do NOT call per forward):
    pad feature dims to LANE, weights -> bf16, biases -> f32 replicated to 8
    sublanes; padded output columns of the last layer get a NEG_BIG bias."""
    n_layers = len(params)
    dims = [params[0][0].shape[0]] + [w.shape[1] for (w, _) in params]
    dims_p = [_round_up(d, LANE) for d in dims]

    prepared = []
    for li, (w, b) in enumerate(params):
        ip, op = dims_p[li], dims_p[li + 1]
        wp = (jnp.zeros((ip, op), jnp.bfloat16)
              .at[: w.shape[0], : w.shape[1]].set(w.astype(jnp.bfloat16)))
        fill = NEG_BIG if li == n_layers - 1 else 0.0
        bp = (jnp.full((SUBLANE, op), fill, jnp.float32)
              .at[:, : b.shape[1]]
              .set(jnp.broadcast_to(b.reshape(1, -1), (SUBLANE, b.shape[1]))))
        prepared.append((wp, bp))
    return tuple(prepared)


@functools.partial(jax.jit, static_argnames=("out_dim", "block_m"))
def actor_forward(x, prepared_params, *, out_dim, block_m=512):
    """x: (B, in_dim) float32. prepared_params: output of prepare_actor_params."""
    n_layers = len(prepared_params)
    B, in_dim = x.shape
    in_p = prepared_params[0][0].shape[0]
    out_p = prepared_params[-1][0].shape[1]

    # ---- adaptive batch tiling ----
    # At least 2 grid steps when the batch allows it (v7x megacore sharding);
    # tile size chosen so batch padding is at most tm-1 rows.
    n_blocks = _cdiv(B, block_m)
    if B >= 2 * SUBLANE:
        n_blocks = max(n_blocks, 2)
    tm = _round_up(_cdiv(B, n_blocks), SUBLANE)
    b_pad = n_blocks * tm

    # Single pad of the activations (feature dim -> lane width, tiny batch tail).
    xp = jnp.pad(x, ((0, b_pad - B), (0, in_p - in_dim)))

    in_specs = [pl.BlockSpec((tm, in_p), lambda i: (i, 0))]
    flat_params = []
    for (wp, bp) in prepared_params:
        ip, op = wp.shape
        in_specs.append(pl.BlockSpec((ip, op), lambda i: (0, 0)))        # resident weight
        in_specs.append(pl.BlockSpec((SUBLANE, op), lambda i: (0, 0)))   # resident bias
        flat_params += [wp, bp]

    out_padded = pl.pallas_call(
        _make_actor_kernel(n_layers),
        out_shape=jax.ShapeDtypeStruct((b_pad, out_p), jnp.float32),
        grid=(n_blocks,),
        in_specs=in_specs,
        out_specs=pl.BlockSpec((tm, out_p), lambda i: (i, 0)),
        compiler_params=pltpu.CompilerParams(dimension_semantics=("parallel",)),
    )(xp, *flat_params)

    return out_padded[:B, :out_dim]


def init_actor_params(key, in_dim, out_dim, hidd_dims):
    """Deterministic init mirroring the nn.Linear shapes of Actor.__init__.
    Weights are returned as (in_features, out_features) = PyTorch weight.T."""
    dims = [in_dim] + list(hidd_dims) + [out_dim]
    params = []
    for i in range(len(dims) - 1):
        key, kw, kb = jax.random.split(key, 3)
        fan_in = dims[i]
        bound = 1.0 / jnp.sqrt(fan_in)
        w = jax.random.uniform(kw, (dims[i], dims[i + 1]), jnp.float32, -bound, bound)
        b = jax.random.uniform(kb, (1, dims[i + 1]), jnp.float32, -bound, bound)
        params.append((w, b))
    return params


def actor_reference(x, params):
    """Pure-JAX (f32) reference of the PyTorch forward for verification."""
    h = x
    for w, b in params[:-1]:
        h = h @ w + b
        h = jnp.maximum(h, 0.05 * h)
    w, b = params[-1]
    logits = h @ w + b
    return jax.nn.softmax(logits, axis=1)


if __name__ == "__main__":
    key = jax.random.PRNGKey(0)

    in_dim = 32
    hidd_dims = [64, 64]
    out_dim = 16

    key, kx, kx2 = jax.random.split(key, 3)
    params = init_actor_params(key, in_dim, out_dim, hidd_dims)
    prepared = prepare_actor_params(params)   # one-time padding / dtype prep

    # --- small batch (single grid step) ---
    batch = 8
    x = jax.random.normal(kx, (batch, in_dim), jnp.float32)
    out = jax.block_until_ready(actor_forward(x, prepared, out_dim=out_dim))
    ref = actor_reference(x, params)
    assert out.shape == (batch, out_dim)
    # bf16 matmul operands (f32 accumulation) vs f32 reference
    assert jnp.allclose(out, ref, atol=5e-3, rtol=5e-2), "mismatch vs reference (small batch)"
    assert jnp.allclose(jnp.sum(out, axis=1), jnp.ones(batch), atol=1e-4)

    # --- ragged batch exercising multi-block grid + tail padding ---
    batch2 = 40
    x2 = jax.random.normal(kx2, (batch2, in_dim), jnp.float32)
    out2 = jax.block_until_ready(actor_forward(x2, prepared, out_dim=out_dim, block_m=16))
    ref2 = actor_reference(x2, params)
    assert out2.shape == (batch2, out_dim)
    assert jnp.allclose(out2, ref2, atol=5e-3, rtol=5e-2), "mismatch vs reference (multi-block)"
    assert jnp.allclose(jnp.sum(out2, axis=1), jnp.ones(batch2), atol=1e-4)

    print("KERNEL_OK")
</pallas_src>

<mosaic_0001>
module attributes {stable_mosaic.version = 11 : i64} {
  func.func @kernel(%arg0: i32, %arg1: memref<8x128xf32, #tpu.memory_space<vmem>>, %arg2: memref<128x128xbf16, #tpu.memory_space<vmem>>, %arg3: memref<8x128xf32, #tpu.memory_space<vmem>>, %arg4: memref<128x128xbf16, #tpu.memory_space<vmem>>, %arg5: memref<8x128xf32, #tpu.memory_space<vmem>>, %arg6: memref<128x128xbf16, #tpu.memory_space<vmem>>, %arg7: memref<8x128xf32, #tpu.memory_space<vmem>>, %arg8: memref<8x128xf32, #tpu.memory_space<vmem>>) attributes {dimension_semantics = [#tpu.dimension_semantics<parallel>], iteration_bounds = array<i64: 1>, scalar_prefetch = 0 : i64, scratch_operands = 0 : i64, tpu.core_type = #tpu.core_type<tc>, window_params = [{transform_indices = @transform_0, window_bounds = array<i64: 8, 128>}, {pipeline_mode = #tpu.pipeline_mode<synchronous>, transform_indices = @transform_1, window_bounds = array<i64: 128, 128>}, {pipeline_mode = #tpu.pipeline_mode<synchronous>, transform_indices = @transform_2, window_bounds = array<i64: 8, 128>}, {pipeline_mode = #tpu.pipeline_mode<synchronous>, transform_indices = @transform_3, window_bounds = array<i64: 128, 128>}, {pipeline_mode = #tpu.pipeline_mode<synchronous>, transform_indices = @transform_4, window_bounds = array<i64: 8, 128>}, {pipeline_mode = #tpu.pipeline_mode<synchronous>, transform_indices = @transform_5, window_bounds = array<i64: 128, 128>}, {pipeline_mode = #tpu.pipeline_mode<synchronous>, transform_indices = @transform_6, window_bounds = array<i64: 8, 128>}, {transform_indices = @transform_7, window_bounds = array<i64: 8, 128>}]} {
    %c0 = arith.constant 0 : index
    %c0_0 = arith.constant 0 : index
    %0 = vector.load %arg1[%c0, %c0_0] : memref<8x128xf32, #tpu.memory_space<vmem>>, vector<8x128xf32>
    %c0_1 = arith.constant 0 : index
    %c0_2 = arith.constant 0 : index
    %1 = vector.load %arg2[%c0_1, %c0_2] : memref<128x128xbf16, #tpu.memory_space<vmem>>, vector<128x128xbf16>
    %c0_3 = arith.constant 0 : index
    %c0_4 = arith.constant 0 : index
    %2 = vector.load %arg3[%c0_3, %c0_4] : memref<8x128xf32, #tpu.memory_space<vmem>>, vector<1x128xf32>
    %3 = arith.truncf %0 : vector<8x128xf32> to vector<8x128xbf16>
    %cst = arith.constant dense<0.000000e+00> : vector<8x128xf32>
    %4 = tpu.matmul %3, %1, %cst {dimension_numbers = #tpu.dot_dimension_numbers<[1], [0], [0], [1], [0, 0, 1, 1], [], []>} : vector<8x128xbf16>, vector<128x128xbf16>, vector<8x128xf32> -> vector<8x128xf32>
    %5 = vector.broadcast %2 : vector<1x128xf32> to vector<8x128xf32>
    %6 = arith.addf %4, %5 : vector<8x128xf32>
    %cst_5 = arith.constant 5.000000e-02 : f32
    %7 = vector.broadcast %cst_5 : f32 to vector<8x128xf32>
    %8 = arith.mulf %7, %6 : vector<8x128xf32>
    %9 = arith.maximumf %6, %8 : vector<8x128xf32>
    %c0_6 = arith.constant 0 : index
    %c0_7 = arith.constant 0 : index
    %10 = vector.load %arg4[%c0_6, %c0_7] : memref<128x128xbf16, #tpu.memory_space<vmem>>, vector<128x128xbf16>
    %c0_8 = arith.constant 0 : index
    %c0_9 = arith.constant 0 : index
    %11 = vector.load %arg5[%c0_8, %c0_9] : memref<8x128xf32, #tpu.memory_space<vmem>>, vector<1x128xf32>
    %12 = arith.truncf %9 : vector<8x128xf32> to vector<8x128xbf16>
    %cst_10 = arith.constant dense<0.000000e+00> : vector<8x128xf32>
    %13 = tpu.matmul %12, %10, %cst_10 {dimension_numbers = #tpu.dot_dimension_numbers<[1], [0], [0], [1], [0, 0, 1, 1], [], []>} : vector<8x128xbf16>, vector<128x128xbf16>, vector<8x128xf32> -> vector<8x128xf32>
    %14 = vector.broadcast %11 : vector<1x128xf32> to vector<8x128xf32>
    %15 = arith.addf %13, %14 : vector<8x128xf32>
    %cst_11 = arith.constant 5.000000e-02 : f32
    %16 = vector.broadcast %cst_11 : f32 to vector<8x128xf32>
    %17 = arith.mulf %16, %15 : vector<8x128xf32>
    %18 = arith.maximumf %15, %17 : vector<8x128xf32>
    %c0_12 = arith.constant 0 : index
    %c0_13 = arith.constant 0 : index
    %19 = vector.load %arg6[%c0_12, %c0_13] : memref<128x128xbf16, #tpu.memory_space<vmem>>, vector<128x128xbf16>
    %c0_14 = arith.constant 0 : index
    %c0_15 = arith.constant 0 : index
    %20 = vector.load %arg7[%c0_14, %c0_15] : memref<8x128xf32, #tpu.memory_space<vmem>>, vector<1x128xf32>
    %21 = arith.truncf %18 : vector<8x128xf32> to vector<8x128xbf16>
    %cst_16 = arith.constant dense<0.000000e+00> : vector<8x128xf32>
    %22 = tpu.matmul %21, %19, %cst_16 {dimension_numbers = #tpu.dot_dimension_numbers<[1], [0], [0], [1], [0, 0, 1, 1], [], []>} : vector<8x128xbf16>, vector<128x128xbf16>, vector<8x128xf32> -> vector<8x128xf32>
    %23 = vector.broadcast %20 : vector<1x128xf32> to vector<8x128xf32>
    %24 = arith.addf %22, %23 : vector<8x128xf32>
    %cst_17 = arith.constant dense<0xFF800000> : vector<8xf32>
    %25 = vector.multi_reduction <maximumf>, %24, %cst_17 [1] : vector<8x128xf32> to vector<8xf32>
    %26 = vector.shape_cast %25 : vector<8xf32> to vector<8x1xf32>
    %27 = vector.broadcast %26 : vector<8x1xf32> to vector<8x128xf32>
    %28 = arith.subf %24, %27 : vector<8x128xf32>
    %29 = math.exp %28 : vector<8x128xf32>
    %cst_18 = arith.constant dense<0.000000e+00> : vector<8xf32>
    %30 = vector.multi_reduction <add>, %29, %cst_18 [1] : vector<8x128xf32> to vector<8xf32>
    %31 = vector.shape_cast %30 : vector<8xf32> to vector<8x1xf32>
    %32 = vector.broadcast %31 : vector<8x1xf32> to vector<8x128xf32>
    %33 = arith.divf %29, %32 : vector<8x128xf32>
    %c0_19 = arith.constant 0 : index
    %c0_20 = arith.constant 0 : index
    %34 = vector.load %arg8[%c0_19, %c0_20] : memref<8x128xf32, #tpu.memory_space<vmem>>, vector<8x128xf32>
    tpu.vector_store %arg8[%c0_19, %c0_20], %33 {strides = array<i32>} : memref<8x128xf32, #tpu.memory_space<vmem>>, vector<8x128xf32>,
    return
  }
  func.func @transform_0(%arg0: i32) -> (i32, i32) {
    %c0_i32 = arith.constant 0 : i32
    %c0_i32_0 = arith.constant 0 : i32
    return %arg0, %c0_i32 : i32, i32
  }
  func.func @transform_1(%arg0: i32) -> (i32, i32) {
    %c0_i32 = arith.constant 0 : i32
    %c0_i32_0 = arith.constant 0 : i32
    %c0_i32_1 = arith.constant 0 : i32
    return %c0_i32, %c0_i32_0 : i32, i32
  }
  func.func @transform_2(%arg0: i32) -> (i32, i32) {
    %c0_i32 = arith.constant 0 : i32
    %c0_i32_0 = arith.constant 0 : i32
    %c0_i32_1 = arith.constant 0 : i32
    return %c0_i32, %c0_i32_0 : i32, i32
  }
  func.func @transform_3(%arg0: i32) -> (i32, i32) {
    %c0_i32 = arith.constant 0 : i32
    %c0_i32_0 = arith.constant 0 : i32
    %c0_i32_1 = arith.constant 0 : i32
    return %c0_i32, %c0_i32_0 : i32, i32
  }
  func.func @transform_4(%arg0: i32) -> (i32, i32) {
    %c0_i32 = arith.constant 0 : i32
    %c0_i32_0 = arith.constant 0 : i32
    %c0_i32_1 = arith.constant 0 : i32
    return %c0_i32, %c0_i32_0 : i32, i32
  }
  func.func @transform_5(%arg0: i32) -> (i32, i32) {
    %c0_i32 = arith.constant 0 : i32
    %c0_i32_0 = arith.constant 0 : i32
    %c0_i32_1 = arith.constant 0 : i32
    return %c0_i32, %c0_i32_0 : i32, i32
  }
  func.func @transform_6(%arg0: i32) -> (i32, i32) {
    %c0_i32 = arith.constant 0 : i32
    %c0_i32_0 = arith.constant 0 : i32
    %c0_i32_1 = arith.constant 0 : i32
    return %c0_i32, %c0_i32_0 : i32, i32
  }
  func.func @transform_7(%arg0: i32) -> (i32, i32) {
    %c0_i32 = arith.constant 0 : i32
    %c0_i32_0 = arith.constant 0 : i32
    return %arg0, %c0_i32 : i32, i32
  }
}

</mosaic_0001>

<llo_original>
// kernel: actor_forward.1
$region0: #{actor_forward.1}
  #allocation0 [shape = 'u32[]', space=smem, size = 0x4, offset = 0x4, fixed_abs, tag = 'smem constant byte address 0x4 - core index']
  #allocation1 [shape = 'u32[144,128]{1,0:T(1,128)}', space=vmem, size = 0x12000, scoped, tag = 'internal scratch']
  %s0 = inlined_call_operand.vmem [shape: f32[8,128], index: 0, kind: input, shape index: {}]
  %s1 = inlined_call_operand.hbm [shape: bf16[128,128], index: 1, kind: input, shape index: {}]
  %s2 = inlined_call_operand.vmem [shape: f32[8,128], index: 2, kind: input, shape index: {}]
  %s3 = inlined_call_operand.hbm [shape: bf16[128,128], index: 3, kind: input, shape index: {}]
  %s4 = inlined_call_operand.vmem [shape: f32[8,128], index: 4, kind: input, shape index: {}]
  %s5 = inlined_call_operand.hbm [shape: bf16[128,128], index: 5, kind: input, shape index: {}]
  %s6 = inlined_call_operand.vmem [shape: f32[8,128], index: 6, kind: input, shape index: {}]
  %s7 = inlined_call_operand.hbm [shape: f32[8,128], index: 7, kind: output, shape index: {}]
  %s8 = sld [smem:[#allocation0]]
  $region50: #{actor_forward.1} parent=0
    _
  %s10 = ssub.s32 1, %s8
  %s11 = scalar_select 0, %s10, %s8
  $region1: #{actor_forward.1} parent=0
    #allocation2 [shape = 'u8[32768]{0}', space=vmem, size = 0x8000, scoped, tag = 'input window, operand 1, single buffered']
    #allocation3 [shape = 's32[1]{0}', space=sflag, size = 0x4, scoped, tag = 'scoped memory for actor_forward.1']
    #allocation4 [shape = 's32[1]{0}', space=sflag, size = 0x4, scoped, tag = 'scoped memory for actor_forward.1']
    #allocation5 [shape = 'u8[32768]{0}', space=vmem, size = 0x8000, scoped, tag = 'input window, operand 3, single buffered']
    #allocation6 [shape = 's32[1]{0}', space=sflag, size = 0x4, scoped, tag = 'scoped memory for actor_forward.1']
    #allocation7 [shape = 'u8[32768]{0}', space=vmem, size = 0x8000, scoped, tag = 'input window, operand 5, single buffered']
    #allocation8 [shape = 'u8[4096]{0}', space=vmem, size = 0x1000, scoped, tag = 'output window, operand 0, single buffered']
    %12 = vsyncpa [#allocation3], 0
    %13 = vsyncpa [#allocation6], 0
    %14 = vsyncpa [#allocation4], 0
    // Predicated region
    $region2: #{actor_forward.1} parent=1 // pred_check
      _
    $region3: #{actor_forward.1} parent=1 // pred_check_branch
      %16 = sbr.rel (0) target = $region5
    $region4: #{actor_forward.1} parent=1 // pred_region
      _
    $region5: #{actor_forward.1} parent=1 // pred_fallthru
      _
    // Predicated region
    $region6: #{actor_forward.1} parent=1 // pred_check
      _
    $region7: #{actor_forward.1} parent=1 // pred_check_branch
      %18 = sbr.rel (0) target = $region9
    $region8: #{actor_forward.1} parent=1 // pred_region
      %s20 = ssub.s32 1024, 1024
      %21 = vsyncadd [#allocation3], %s20
      %s22 = sshll.u32 [#allocation2], 4
      %s23 = int_to_ptr.vmem [resolvable:$true] %s22
      %28 = dma.hbm_to_vmem [thread:$0]  %s1, 1024, %s23, [#allocation3], 64, 64, 4
    $region9: #{actor_forward.1} parent=1 // pred_fallthru
      _
    // Predicated region
    $region10: #{actor_forward.1} parent=1 // pred_check
      _
    $region11: #{actor_forward.1} parent=1 // pred_check_branch
      %30 = sbr.rel (0) target = $region13
    $region12: #{actor_forward.1} parent=1 // pred_region
      _
    $region13: #{actor_forward.1} parent=1 // pred_fallthru
      _
    // Predicated region
    $region14: #{actor_forward.1} parent=1 // pred_check
      _
    $region15: #{actor_forward.1} parent=1 // pred_check_branch
      %32 = sbr.rel (0) target = $region17
    $region16: #{actor_forward.1} parent=1 // pred_region
      %s34 = ssub.s32 1024, 1024
      %35 = vsyncadd [#allocation6], %s34
      %s36 = sshll.u32 [#allocation5], 4
      %s37 = int_to_ptr.vmem [resolvable:$true] %s36
      %42 = dma.hbm_to_vmem [thread:$0]  %s3, 1024, %s37, [#allocation6], 64, 64, 4
    $region17: #{actor_forward.1} parent=1 // pred_fallthru
      _
    // Predicated region
    $region18: #{actor_forward.1} parent=1 // pred_check
      _
    $region19: #{actor_forward.1} parent=1 // pred_check_branch
      %44 = sbr.rel (0) target = $region21
    $region20: #{actor_forward.1} parent=1 // pred_region
      _
    $region21: #{actor_forward.1} parent=1 // pred_fallthru
      _
    // Predicated region
    $region22: #{actor_forward.1} parent=1 // pred_check
      _
    $region23: #{actor_forward.1} parent=1 // pred_check_branch
      %46 = sbr.rel (0) target = $region25
    $region24: #{actor_forward.1} parent=1 // pred_region
      %s48 = ssub.s32 1024, 1024
      %49 = vsyncadd [#allocation6], %s48
      %s50 = sshll.u32 [#allocation7], 4
      %s51 = int_to_ptr.vmem [resolvable:$true] %s50
      %56 = dma.hbm_to_vmem [thread:$0]  %s5, 1024, %s51, [#allocation6], 64, 64, 4
    $region25: #{actor_forward.1} parent=1 // pred_fallthru
      _
    // Predicated region
    $region26: #{actor_forward.1} parent=1 // pred_check
      _
    $region27: #{actor_forward.1} parent=1 // pred_check_branch
      %58 = sbr.rel (0) target = $region29
    $region28: #{actor_forward.1} parent=1 // pred_region
      _
    $region29: #{actor_forward.1} parent=1 // pred_fallthru
      _
    // Predicated region
    $region30: #{actor_forward.1} parent=1 // pred_check
      _
    $region31: #{actor_forward.1} parent=1 // pred_check_branch
      %60 = sbr.rel (0) target = $region33
    $region32: #{actor_forward.1} parent=1 // pred_region
      %61 = dma.done [#allocation3], 1024
    $region33: #{actor_forward.1} parent=1 // pred_fallthru
      _
    // Predicated region
    $region34: #{actor_forward.1} parent=1 // pred_check
      _
    $region35: #{actor_forward.1} parent=1 // pred_check_branch
      %63 = sbr.rel (0) target = $region37
    $region36: #{actor_forward.1} parent=1 // pred_region
      %64 = dma.done [#allocation6], 1024
    $region37: #{actor_forward.1} parent=1 // pred_fallthru
      _
    // Predicated region
    $region38: #{actor_forward.1} parent=1 // pred_check
      _
    $region39: #{actor_forward.1} parent=1 // pred_check_branch
      %66 = sbr.rel (0) target = $region41
    $region40: #{actor_forward.1} parent=1 // pred_region
      %67 = dma.done [#allocation6], 1024
    $region41: #{actor_forward.1} parent=1 // pred_fallthru
      _
    %v69 = vld [vmem:[%s0] sm:$0xff]
    %v70 = vld [vmem:[#allocation2] sm:$0xf]
    %v71 = vld [vmem:[#allocation2 + $0x4] sm:$0xf]
    %v72 = vld [vmem:[#allocation2 + $0x8] sm:$0xf]
    %v73 = vld [vmem:[#allocation2 + $0xc] sm:$0xf]
    %v74 = vld [vmem:[#allocation2 + $0x10] sm:$0xf]
    %v75 = vld [vmem:[#allocation2 + $0x14] sm:$0xf]
    %v76 = vld [vmem:[#allocation2 + $0x18] sm:$0xf]
    %v77 = vld [vmem:[#allocation2 + $0x1c] sm:$0xf]
    %v78 = vld [vmem:[#allocation2 + $0x20] sm:$0xf]
    %v79 = vld [vmem:[#allocation2 + $0x24] sm:$0xf]
    %v80 = vld [vmem:[#allocation2 + $0x28] sm:$0xf]
    %v81 = vld [vmem:[#allocation2 + $0x2c] sm:$0xf]
    %v82 = vld [vmem:[#allocation2 + $0x30] sm:$0xf]
    %v83 = vld [vmem:[#allocation2 + $0x34] sm:$0xf]
    %v84 = vld [vmem:[#allocation2 + $0x38] sm:$0xf]
    %v85 = vld [vmem:[#allocation2 + $0x3c] sm:$0xf]
    %v86 = vld [vmem:[%s2] sm:$0x1]
    %v87 = vpack.c.bf16 %v69, %v69
    %v88 = vlaneseq
    %v89 = vshrl.u32 %v88, 7
    %v90 = vsub.s32 0, %v89
    %v91 = vrot.slane %v86, %v90
    %v108 = vunpack.c.l.b16 %v70
    %v109 = vunpack.c.l.b16 %v71
    %v110 = vunpack.c.l.b16 %v72
    %v111 = vunpack.c.l.b16 %v73
    %v112 = vunpack.c.l.b16 %v74
    %v113 = vunpack.c.l.b16 %v75
    %v114 = vunpack.c.l.b16 %v76
    %v115 = vunpack.c.l.b16 %v77
    %v116 = vunpack.c.l.b16 %v78
    %v117 = vunpack.c.l.b16 %v79
    %v118 = vunpack.c.l.b16 %v80
    %v119 = vunpack.c.l.b16 %v81
    %v120 = vunpack.c.l.b16 %v82
    %v121 = vunpack.c.l.b16 %v83
    %v122 = vunpack.c.l.b16 %v84
    %v123 = vunpack.c.l.b16 %v85
    %v124 = vpack.c.b16 %v109, %v108
    %v125 = vpack.c.b16 %v111, %v110
    %v126 = vpack.c.b16 %v113, %v112
    %v127 = vpack.c.b16 %v115, %v114
    %v128 = vpack.c.b16 %v117, %v116
    %v129 = vpack.c.b16 %v119, %v118
    %v130 = vpack.c.b16 %v121, %v120
    %v131 = vpack.c.b16 %v123, %v122
    %140 = vmatprep.subr.bf16.mxu0 0
    %141 = vmatpush1.bf16.msra.mxu0 %v131
    %142 = vmatprep.subr.bf16.mxu0 0
    %143 = vmatpush1.bf16.msra.mxu0 %v130
    %144 = vmatprep.subr.bf16.mxu0 0
    %145 = vmatpush1.bf16.msra.mxu0 %v129
    %146 = vmatprep.subr.bf16.mxu0 0
    %147 = vmatpush1.bf16.msra.mxu0 %v128
    %148 = vmatprep.subr.bf16.mxu0 0
    %149 = vmatpush1.bf16.msra.mxu0 %v127
    %150 = vmatprep.subr.bf16.mxu0 0
    %151 = vmatpush1.bf16.msra.mxu0 %v126
    %152 = vmatprep.subr.bf16.mxu0 0
    %153 = vmatpush1.bf16.msra.mxu0 %v125
    %154 = vmatprep.subr.bf16.mxu0 0
    %155 = vmatpush1.bf16.msra.mxu0 %v124
    %156 = vmatprep.subr.bf16.mxu0 0
    %157 = vmatpush2.bf16.msra.mxu0 0
    %158 = vmatprep.subr.bf16.mxu0 0
    %159 = vmatpush2.bf16.msra.mxu0 0
    %160 = vmatprep.subr.bf16.mxu0 0
    %161 = vmatpush2.bf16.msra.mxu0 0
    %162 = vmatprep.subr.bf16.mxu0 0
    %163 = vmatpush2.bf16.msra.mxu0 0
    %164 = vmatprep.subr.bf16.mxu0 0
    %165 = vmatpush2.bf16.msra.mxu0 0
    %166 = vmatprep.subr.bf16.mxu0 0
    %167 = vmatpush2.bf16.msra.mxu0 0
    %168 = vmatprep.subr.bf16.mxu0 0
    %169 = vmatpush2.bf16.msra.mxu0 0
    %170 = vmatprep.subr.bf16.mxu0 0
    %171 = vmatpush2.bf16.msra.mxu0 0
    %172 = vmatprep.mubr.bf16.mxu0 0
    %173 = vmatmul.mubr.bf16.gmra.mxu0 %v87
    %v174 = vpop.f32.mrf.mxu0
    %v175 = vadd.f32 %v91, %v174
    %v176 = vpop.f32.mrf.mxu0
    %v177 = vpop.f32.mrf.mxu0
    %v178 = vpop.f32.mrf.mxu0
    %179 = vdwg.mxu0
    %v180 = vmul.f32 %v175, 0.05
    %v181 = vmax.f32 %v175, %v180
    %v182 = vld [vmem:[#allocation5] sm:$0xf]
    %v183 = vld [vmem:[#allocation5 + $0x4] sm:$0xf]
    %v184 = vld [vmem:[#allocation5 + $0x8] sm:$0xf]
    %v185 = vld [vmem:[#allocation5 + $0xc] sm:$0xf]
    %v186 = vld [vmem:[#allocation5 + $0x10] sm:$0xf]
    %v187 = vld [vmem:[#allocation5 + $0x14] sm:$0xf]
    %v188 = vld [vmem:[#allocation5 + $0x18] sm:$0xf]
    %v189 = vld [vmem:[#allocation5 + $0x1c] sm:$0xf]
    %v190 = vld [vmem:[#allocation5 + $0x20] sm:$0xf]
    %v191 = vld [vmem:[#allocation5 + $0x24] sm:$0xf]
    %v192 = vld [vmem:[#allocation5 + $0x28] sm:$0xf]
    %v193 = vld [vmem:[#allocation5 + $0x2c] sm:$0xf]
    %v194 = vld [vmem:[#allocation5 + $0x30] sm:$0xf]
    %v195 = vld [vmem:[#allocation5 + $0x34] sm:$0xf]
    %v196 = vld [vmem:[#allocation5 + $0x38] sm:$0xf]
    %v197 = vld [vmem:[#allocation5 + $0x3c] sm:$0xf]
    %v198 = vld [vmem:[%s4] sm:$0x1]
    %v199 = vpack.c.bf16 %v181, %v181
    %v200 = vlaneseq
    %v201 = vshrl.u32 %v200, 7
    %v202 = vsub.s32 0, %v201
    %v203 = vrot.slane %v198, %v202
    %v220 = vunpack.c.l.b16 %v182
    %v221 = vunpack.c.l.b16 %v183
    %v222 = vunpack.c.l.b16 %v184
    %v223 = vunpack.c.l.b16 %v185
    %v224 = vunpack.c.l.b16 %v186
    %v225 = vunpack.c.l.b16 %v187
    %v226 = vunpack.c.l.b16 %v188
    %v227 = vunpack.c.l.b16 %v189
    %v228 = vunpack.c.l.b16 %v190
    %v229 = vunpack.c.l.b16 %v191
    %v230 = vunpack.c.l.b16 %v192
    %v231 = vunpack.c.l.b16 %v193
    %v232 = vunpack.c.l.b16 %v194
    %v233 = vunpack.c.l.b16 %v195
    %v234 = vunpack.c.l.b16 %v196
    %v235 = vunpack.c.l.b16 %v197
    %v236 = vpack.c.b16 %v221, %v220
    %v237 = vpack.c.b16 %v223, %v222
    %v238 = vpack.c.b16 %v225, %v224
    %v239 = vpack.c.b16 %v227, %v226
    %v240 = vpack.c.b16 %v229, %v228
    %v241 = vpack.c.b16 %v231, %v230
    %v242 = vpack.c.b16 %v233, %v232
    %v243 = vpack.c.b16 %v235, %v234
    %252 = vmatprep.subr.bf16.mxu0 0
    %253 = vmatpush1.bf16.msra.mxu0 %v243
    %254 = vmatprep.subr.bf16.mxu0 0
    %255 = vmatpush1.bf16.msra.mxu0 %v242
    %256 = vmatprep.subr.bf16.mxu0 0
    %257 = vmatpush1.bf16.msra.mxu0 %v241
    %258 = vmatprep.subr.bf16.mxu0 0
    %259 = vmatpush1.bf16.msra.mxu0 %v240
    %260 = vmatprep.subr.bf16.mxu0 0
    %261 = vmatpush1.bf16.msra.mxu0 %v239
    %262 = vmatprep.subr.bf16.mxu0 0
    %263 = vmatpush1.bf16.msra.mxu0 %v238
    %264 = vmatprep.subr.bf16.mxu0 0
    %265 = vmatpush1.bf16.msra.mxu0 %v237
    %266 = vmatprep.subr.bf16.mxu0 0
    %267 = vmatpush1.bf16.msra.mxu0 %v236
    %268 = vmatprep.subr.bf16.mxu0 0
    %269 = vmatpush2.bf16.msra.mxu0 0
    %270 = vmatprep.subr.bf16.mxu0 0
    %271 = vmatpush2.bf16.msra.mxu0 0
    %272 = vmatprep.subr.bf16.mxu0 0
    %273 = vmatpush2.bf16.msra.mxu0 0
    %274 = vmatprep.subr.bf16.mxu0 0
    %275 = vmatpush2.bf16.msra.mxu0 0
    %276 = vmatprep.subr.bf16.mxu0 0
    %277 = vmatpush2.bf16.msra.mxu0 0
    %278 = vmatprep.subr.bf16.mxu0 0
    %279 = vmatpush2.bf16.msra.mxu0 0
    %280 = vmatprep.subr.bf16.mxu0 0
    %281 = vmatpush2.bf16.msra.mxu0 0
    %282 = vmatprep.subr.bf16.mxu0 0
    %283 = vmatpush2.bf16.msra.mxu0 0
    %284 = vmatprep.mubr.bf16.mxu0 0
    %285 = vmatmul.mubr.bf16.gmra.mxu0 %v199
    %v286 = vpop.f32.mrf.mxu0
    %v287 = vadd.f32 %v203, %v286
    %v288 = vpop.f32.mrf.mxu0
    %v289 = vpop.f32.mrf.mxu0
    %v290 = vpop.f32.mrf.mxu0
    %291 = vdwg.mxu0
    %v292 = vmul.f32 %v287, 0.05
    %v293 = vmax.f32 %v287, %v292
    %v294 = vld [vmem:[#allocation7] sm:$0xf]
    %v295 = vld [vmem:[#allocation7 + $0x4] sm:$0xf]
    %v296 = vld [vmem:[#allocation7 + $0x8] sm:$0xf]
    %v297 = vld [vmem:[#allocation7 + $0xc] sm:$0xf]
    %v298 = vld [vmem:[#allocation7 + $0x10] sm:$0xf]
    %v299 = vld [vmem:[#allocation7 + $0x14] sm:$0xf]
    %v300 = vld [vmem:[#allocation7 + $0x18] sm:$0xf]
    %v301 = vld [vmem:[#allocation7 + $0x1c] sm:$0xf]
    %v302 = vld [vmem:[#allocation7 + $0x20] sm:$0xf]
    %v303 = vld [vmem:[#allocation7 + $0x24] sm:$0xf]
    %v304 = vld [vmem:[#allocation7 + $0x28] sm:$0xf]
    %v305 = vld [vmem:[#allocation7 + $0x2c] sm:$0xf]
    %v306 = vld [vmem:[#allocation7 + $0x30] sm:$0xf]
    %v307 = vld [vmem:[#allocation7 + $0x34] sm:$0xf]
    %v308 = vld [vmem:[#allocation7 + $0x38] sm:$0xf]
    %v309 = vld [vmem:[#allocation7 + $0x3c] sm:$0xf]
    %v310 = vld [vmem:[%s6] sm:$0x1]
    %v311 = vpack.c.bf16 %v293, %v293
    %v312 = vlaneseq
    %v313 = vshrl.u32 %v312, 7
    %v314 = vsub.s32 0, %v313
    %v315 = vrot.slane %v310, %v314
    %v332 = vunpack.c.l.b16 %v294
    %v333 = vunpack.c.l.b16 %v295
    %v334 = vunpack.c.l.b16 %v296
    %v335 = vunpack.c.l.b16 %v297
    %v336 = vunpack.c.l.b16 %v298
    %v337 = vunpack.c.l.b16 %v299
    %v338 = vunpack.c.l.b16 %v300
    %v339 = vunpack.c.l.b16 %v301
    %v340 = vunpack.c.l.b16 %v302
    %v341 = vunpack.c.l.b16 %v303
    %v342 = vunpack.c.l.b16 %v304
    %v343 = vunpack.c.l.b16 %v305
    %v344 = vunpack.c.l.b16 %v306
    %v345 = vunpack.c.l.b16 %v307
    %v346 = vunpack.c.l.b16 %v308
    %v347 = vunpack.c.l.b16 %v309
    %v348 = vpack.c.b16 %v333, %v332
    %v349 = vpack.c.b16 %v335, %v334
    %v350 = vpack.c.b16 %v337, %v336
    %v351 = vpack.c.b16 %v339, %v338
    %v352 = vpack.c.b16 %v341, %v340
    %v353 = vpack.c.b16 %v343, %v342
    %v354 = vpack.c.b16 %v345, %v344
    %v355 = vpack.c.b16 %v347, %v346
    %364 = vmatprep.subr.bf16.mxu0 0
    %365 = vmatpush1.bf16.msra.mxu0 %v355
    %366 = vmatprep.subr.bf16.mxu0 0
    %367 = vmatpush1.bf16.msra.mxu0 %v354
    %368 = vmatprep.subr.bf16.mxu0 0
    %369 = vmatpush1.bf16.msra.mxu0 %v353
    %370 = vmatprep.subr.bf16.mxu0 0
    %371 = vmatpush1.bf16.msra.mxu0 %v352
    %372 = vmatprep.subr.bf16.mxu0 0
    %373 = vmatpush1.bf16.msra.mxu0 %v351
    %374 = vmatprep.subr.bf16.mxu0 0
    %375 = vmatpush1.bf16.msra.mxu0 %v350
    %376 = vmatprep.subr.bf16.mxu0 0
    %377 = vmatpush1.bf16.msra.mxu0 %v349
    %378 = vmatprep.subr.bf16.mxu0 0
    %379 = vmatpush1.bf16.msra.mxu0 %v348
    %380 = vmatprep.subr.bf16.mxu0 0
    %381 = vmatpush2.bf16.msra.mxu0 0
    %382 = vmatprep.subr.bf16.mxu0 0
    %383 = vmatpush2.bf16.msra.mxu0 0
    %384 = vmatprep.subr.bf16.mxu0 0
    %385 = vmatpush2.bf16.msra.mxu0 0
    %386 = vmatprep.subr.bf16.mxu0 0
    %387 = vmatpush2.bf16.msra.mxu0 0
    %388 = vmatprep.subr.bf16.mxu0 0
    %389 = vmatpush2.bf16.msra.mxu0 0
    %390 = vmatprep.subr.bf16.mxu0 0
    %391 = vmatpush2.bf16.msra.mxu0 0
    %392 = vmatprep.subr.bf16.mxu0 0
    %393 = vmatpush2.bf16.msra.mxu0 0
    %394 = vmatprep.subr.bf16.mxu0 0
    %395 = vmatpush2.bf16.msra.mxu0 0
    %396 = vmatprep.mubr.bf16.mxu0 0
    %397 = vmatmul.mubr.bf16.gmra.mxu0 %v311
    %v398 = vpop.f32.mrf.mxu0
    %v399 = vadd.f32 %v315, %v398
    %v400 = vpop.f32.mrf.mxu0
    %v401 = vpop.f32.mrf.mxu0
    %v402 = vpop.f32.mrf.mxu0
    %403 = vdwg.mxu0
    %404 = vmax.xlane.f32.xlu0 %v399
    %v405 = vpop.xlane.xlu0 %404
    %v406 = vsub.f32 %v399, %v405
    %v407 = vmul.f32 %v406, 1.442695
    %v408 = vpow.pop %v407
    %409 = vadd.xlane.f32.xlu0 %v408
    %v410 = vpop.xlane.xlu0 %409
    %v411 = vrcp.pop %v410
    %v412 = vmul.f32 %v408, %v411
    %413 = vst [vmem:[#allocation8] sm:$0xff] %v412
    // Predicated region
    $region42: #{actor_forward.1} parent=1 // pred_check
      _
    $region43: #{actor_forward.1} parent=1 // pred_check_branch
      %415 = sbr.rel (0) target = $region45
    $region44: #{actor_forward.1} parent=1 // pred_region
      %s417 = ssub.s32 128, 128
      %418 = vsyncadd [#allocation4], %s417
      %s420 = sshll.u32 [#allocation8], 4
      %s421 = int_to_ptr.vmem [resolvable:$true] %s420
      %423 = dma.vmem_to_hbm [thread:$0]  %s421, 128, %s7, [#allocation4]
    $region45: #{actor_forward.1} parent=1 // pred_fallthru
      _
    // Predicated region
    $region46: #{actor_forward.1} parent=1 // pred_check
      _
    $region47: #{actor_forward.1} parent=1 // pred_check_branch
      %425 = sbr.rel (0) target = $region49
    $region48: #{actor_forward.1} parent=1 // pred_region
      %426 = dma.done [#allocation4], 128
    $region49: #{actor_forward.1} parent=1 // pred_fallthru
      _
    %427 = vsyncpa [#allocation3], 1
    %428 = vsyncpa [#allocation6], 1
    %429 = vsyncpa [#allocation4], 1

</llo_original>
